<compile_context>
chip_gen: v7x
topology: tpu7x:2x2x1
jax: 0.10.0
libtpu: 0.0.40
codegen_flags: <defaults>
</compile_context>

<pallas_src>
import functools
import math

import jax
import jax.numpy as jnp
from jax import lax
from jax.experimental import pallas as pl
from jax.experimental.pallas import tpu as pltpu

# ---- synthetic hparams (efficient_vdvae-style, deterministic, in-script) ----
USE_1X1_CONV = True
STABLE_INIT = True
DOWN_N_BLOCKS_PER_RES = [2, 2]
DOWN_STRIDES = [2, 2]
INIT_SCALER = (math.sqrt(1.0 / float(sum(DOWN_N_BLOCKS_PER_RES) + len(DOWN_STRIDES)))
               if STABLE_INIT else 1.0)


# --------------------------- pltpu.roll sign probe ----------------------------

@functools.lru_cache(maxsize=None)
def _roll_is_read_ahead():
    """True  => pltpu.roll(x, s, axis)[..., i] == x[..., (i + s) % n]  (read-ahead)
       False => it matches jnp.roll               (read-behind).
    Probed once on the device so the conv-tap shifts use the correct sign."""
    n = 256
    x = jnp.tile(jnp.arange(n, dtype=jnp.float32)[None, :], (8, 1))

    def k(x_ref, o_ref):
        o_ref[...] = pltpu.roll(x_ref[...], shift=1, axis=1)

    out = pl.pallas_call(k, out_shape=jax.ShapeDtypeStruct((8, n), jnp.float32))(x)
    return bool(jax.device_get(out)[0, 0] == 1.0)


# ------------------------------ fused Pallas kernel ---------------------------

def _silu(v):
    return v * jax.nn.sigmoid(v)


def _fused_level_block_up_kernel(*refs, n_blocks, n_layers, K, H, W, strides,
                                 use_skip, roll_read_ahead):
    """Whole LevelBlockUp forward for one batch element, channels-first in VMEM.

    Activations are (C, H*W) slabs: channels on sublanes, flat row-major
    spatial on the lane-dense 128-lane axis.

    Ref order: x, [per block: w_in, b_in, (w3_taps, b3)*n_layers, w_out, b_out],
               (w_skip, b_skip)?, (w_pool_taps, b_pool, sel)?, out_ref, skip_ref.
    """
    it = iter(refs)
    x_ref = next(it)
    blocks = []
    for _ in range(n_blocks):
        w_in, b_in = next(it), next(it)
        mids = [(next(it), next(it)) for _ in range(n_layers)]
        w_out, b_out = next(it), next(it)
        blocks.append((w_in, b_in, mids, w_out, b_out))
    if use_skip:
        w_skip, b_skip = next(it), next(it)
    if strides > 1:
        w_pool, b_pool, sel = next(it), next(it), next(it)
    out_ref = next(it)
    skip_ref = next(it)

    f32 = jnp.float32
    HW = H * W
    p = K // 2

    def shift_for(delta):
        # Shift such that rolled[..., i] == a[..., i + delta] for in-range taps
        # (wrapped lanes are always masked out / discarded by the callers).
        return (delta if roll_read_ahead else -delta) % HW

    # Per-tap flat deltas and 0/1 boundary masks for the KxK 'same' conv,
    # computed ONCE per kernel invocation and shared by all blocks/layers.
    taps = []
    if n_layers > 0:
        flat = lax.broadcasted_iota(jnp.int32, (1, HW), 1)
        row, col = flat // W, flat % W
        for dh in range(K):
            for dw in range(K):
                oh, ow = dh - p, dw - p
                delta = oh * W + ow
                if oh == 0 and ow == 0:
                    taps.append((0, None))
                else:
                    valid = ((row + oh >= 0) & (row + oh < H) &
                             (col + ow >= 0) & (col + ow < W))
                    taps.append((delta, valid.astype(f32)))

    def conv_same_kxk(a, w_taps, b):
        # a: (Cb, HW) pre-activated; w_taps: (K*K, Cb_out, Cb_in); b: (Cb_out, 1)
        acc = None
        for t, (delta, mask) in enumerate(taps):
            v = a if delta == 0 else pltpu.roll(a, shift=shift_for(delta), axis=1)
            if mask is not None:
                v = v * mask                  # zero out-of-bounds taps ('same' pad)
            contrib = jnp.dot(w_taps[t], v, preferred_element_type=f32)
            acc = contrib if acc is None else acc + contrib
        return acc + b[...]

    y = x_ref[0].astype(f32)                 # (Cin, HW), lane-dense

    # TODO(synk): stack per-block weights along a leading axis and use
    # lax.fori_loop if n_blocks*n_layers grows beyond this toy 2x2 config.
    # TODO(synk): cast weights/activations to bf16 at the dots on v6e/v7x
    # (keep f32 accumulation and f32 elementwise math for v5e).
    for (w_in, b_in, mids, w_out, b_out) in blocks:
        inp = y
        # SiLU -> 1x1 in-projection (single MXU dot, lane-dense output)
        h = jnp.dot(w_in[...], _silu(y), preferred_element_type=f32) + b_in[...]
        # n_layers x (SiLU -> KxK 'same' conv) via per-tap roll+mask+dot
        for (w3, b3) in mids:
            h = conv_same_kxk(_silu(h), w3, b3)
        # SiLU -> 1x1 out-projection -> residual add
        y = inp + jnp.dot(w_out[...], _silu(h), preferred_element_type=f32) + b_out[...]

    # Skip projection (1x1 conv): lane-dense (Cskip, HW) store, written once.
    if use_skip:
        sk = jnp.dot(w_skip[...], y, preferred_element_type=f32) + b_skip[...]
        skip_ref[0] = sk.astype(skip_ref.dtype)
    else:
        skip_ref[0] = y.astype(skip_ref.dtype)

    # PoolLayer: kernel == stride conv (+bias) + LeakyReLU(0.1).  Accumulate a
    # full-resolution conv with per-tap rolls + tiny channel dots, then one
    # selection matmul picks the stride-aligned columns.  Kept positions never
    # wrap or bleed across rows (H % s == 0, W % s == 0), so no masks needed.
    if strides > 1:
        s = strides
        full = None
        for dh in range(s):
            for dw in range(s):
                delta = dh * W + dw
                v = y if delta == 0 else pltpu.roll(y, shift=shift_for(delta), axis=1)
                contrib = jnp.dot(w_pool[dh * s + dw], v, preferred_element_type=f32)
                full = contrib if full is None else full + contrib
        pooled = jnp.dot(full, sel[...], preferred_element_type=f32) + b_pool[...]
        pooled = jnp.where(pooled >= 0, pooled, 0.1 * pooled)
        out_ref[0] = pooled.astype(out_ref.dtype)
    else:
        out_ref[0] = y.astype(out_ref.dtype)


# ------------------------------ wrapper ---------------------------------------

def _const_index_map(rank):
    zeros = (0,) * rank
    return lambda n: zeros


def level_block_up_forward(x_nchw, params, *, strides, use_skip):
    """NCHW in -> (pooled NCHW, skip NCHW), matching the PyTorch module."""
    N, c_in, H, W = x_nchw.shape
    HW = H * W
    res_blocks = params["res_blocks"]
    n_blocks = len(res_blocks)
    n_layers = len(res_blocks[0]["mid"])
    c_bneck = res_blocks[0]["w_in"].shape[1]
    K = res_blocks[0]["mid"][0][0].shape[0] if n_layers > 0 else 1

    weights, w_specs = [], []

    def add(arr):
        weights.append(arr)
        w_specs.append(pl.BlockSpec(arr.shape, _const_index_map(arr.ndim)))

    # All matmuls are left-multiplications W (Cout, Cin) @ act (Cin, H*W):
    # weights are transposed once here; KxK weights stacked per tap as
    # (K*K, Cout, Cin); biases become (Cout, 1) columns (lane-broadcast).
    for blk in res_blocks:
        add(blk["w_in"].T)
        add(blk["b_in"].reshape(-1, 1))
        for (w3, b3) in blk["mid"]:
            add(jnp.transpose(w3, (0, 1, 3, 2)).reshape(K * K, c_bneck, c_bneck))
            add(b3.reshape(-1, 1))
        add(blk["w_out"].T)
        add(blk["b_out"].reshape(-1, 1))
    if use_skip:
        c_skip = params["w_skip"].shape[1]
        add(params["w_skip"].T)
        add(params["b_skip"].reshape(-1, 1))
    else:
        c_skip = c_in
    if strides > 1:
        s = strides
        assert H % s == 0 and W % s == 0, "PoolLayer expects H, W divisible by stride"
        c_pool = params["w_pool"].shape[-1]
        Ho, Wo = H // s, W // s
        add(jnp.transpose(params["w_pool"], (0, 1, 3, 2)).reshape(s * s, c_pool, c_in))
        add(params["b_pool"].reshape(-1, 1))
        # 0/1 selection matrix picking the stride-aligned spatial positions.
        q = jnp.arange(Ho * Wo)
        src = (s * (q // Wo)) * W + s * (q % Wo)
        add((jnp.arange(HW)[:, None] == src[None, :]).astype(jnp.float32))
        out_rows, out_cols = c_pool, Ho * Wo
    else:
        Ho, Wo, c_pool = H, W, c_in
        out_rows, out_cols = c_in, HW

    kern = functools.partial(
        _fused_level_block_up_kernel,
        n_blocks=n_blocks, n_layers=n_layers, K=K, H=H, W=W,
        strides=strides, use_skip=use_skip,
        roll_read_ahead=_roll_is_read_ahead())

    # One fused pallas_call for the whole LevelBlockUp; grid = batch, "parallel"
    # so both TensorCores stay busy on v7x.
    # TODO(synk): on single-TC v5e/v6e, fold the batch into the lane axis
    #   ((C, N*H*W) slabs, per-image masks via (iota//W)%H) instead of a
    #   2-step serial grid.
    # TODO(synk): for production resolutions, stripe H across a grid axis with
    #   a K-1 halo so one step's live set fits v7x's 64 MiB VMEM.
    out3d, skip3d = pl.pallas_call(
        kern,
        out_shape=[jax.ShapeDtypeStruct((N, out_rows, out_cols), x_nchw.dtype),
                   jax.ShapeDtypeStruct((N, c_skip, HW), x_nchw.dtype)],
        grid_spec=pltpu.PrefetchScalarGridSpec(
            num_scalar_prefetch=0,
            grid=(N,),
            in_specs=[pl.BlockSpec((1, c_in, HW), lambda n: (n, 0, 0))] + w_specs,
            out_specs=[pl.BlockSpec((1, out_rows, out_cols), lambda n: (n, 0, 0)),
                       pl.BlockSpec((1, c_skip, HW), lambda n: (n, 0, 0))]),
        compiler_params=pltpu.CompilerParams(
            dimension_semantics=("parallel",),
            vmem_limit_bytes=32 * 1024 * 1024),
    )(x_nchw.reshape(N, c_in, HW), *weights)

    out = out3d.reshape(N, c_pool, Ho, Wo)     # already NCHW, no transpose
    skip = skip3d.reshape(N, c_skip, H, W)     # already NCHW, no transpose
    return out, skip


# ------------------------------ parameters ------------------------------------

def init_level_block_up_params(key, *, n_blocks, n_layers, in_filters, filters,
                               bottleneck_ratio, kernel_size, strides,
                               skip_filters, use_skip):
    assert USE_1X1_CONV  # TODO(synk): use_1x1_conv=False path (KxK projections) not wired up
    bneck = int(in_filters * bottleneck_ratio)

    def conv_w(k, shape, scale=0.05):
        return scale * jax.random.normal(k, shape, jnp.float32)

    keys = jax.random.split(key, n_blocks * (2 * n_layers + 4) + 4)
    ki = iter(range(len(keys)))
    params = {"res_blocks": []}
    for _ in range(n_blocks):
        blk = {
            "w_in": conv_w(keys[next(ki)], (in_filters, bneck)),
            "b_in": conv_w(keys[next(ki)], (bneck,)),
            "mid": [],
        }
        for _ in range(n_layers):
            w3 = conv_w(keys[next(ki)], (kernel_size, kernel_size, bneck, bneck))
            b3 = conv_w(keys[next(ki)], (bneck,))
            blk["mid"].append((w3, b3))
        # final 1x1 conv weight is scaled by init_scaler (bias untouched), as in PyTorch
        blk["w_out"] = conv_w(keys[next(ki)], (bneck, in_filters)) * INIT_SCALER
        blk["b_out"] = conv_w(keys[next(ki)], (in_filters,))
        params["res_blocks"].append(blk)
    if use_skip:
        params["w_skip"] = conv_w(keys[next(ki)], (in_filters, skip_filters))
        params["b_skip"] = conv_w(keys[next(ki)], (skip_filters,))
    if strides > 1:
        params["w_pool"] = conv_w(keys[next(ki)], (strides, strides, in_filters, filters))
        params["b_pool"] = conv_w(keys[next(ki)], (filters,))
    return params


# ------------------------------ pure-JAX reference -----------------------------

def _ref_forward(x_nchw, params, *, strides, use_skip):
    def silu(v):
        return v * jax.nn.sigmoid(v)

    def conv(x, w, b, stride=1, padding="SAME"):
        y = lax.conv_general_dilated(x, w, (stride, stride), padding,
                                     dimension_numbers=("NHWC", "HWIO", "NHWC"),
                                     precision=lax.Precision.HIGHEST)
        return y + b

    x = jnp.transpose(x_nchw, (0, 2, 3, 1))
    y = x
    for blk in params["res_blocks"]:
        inp = y
        h = conv(silu(y), blk["w_in"][None, None], blk["b_in"])
        for (w3, b3) in blk["mid"]:
            h = conv(silu(h), w3, b3)
        y = inp + conv(silu(h), blk["w_out"][None, None], blk["b_out"])
    skip = conv(y, params["w_skip"][None, None], params["b_skip"]) if use_skip else y
    if strides > 1:
        p = conv(y, params["w_pool"], params["b_pool"], stride=strides, padding="VALID")
        p = jnp.where(p >= 0, p, 0.1 * p)
    else:
        p = y
    return jnp.transpose(p, (0, 3, 1, 2)), jnp.transpose(skip, (0, 3, 1, 2))


# ------------------------------ main -------------------------------------------

if __name__ == "__main__":
    key = jax.random.PRNGKey(0)
    k_x, k_p = jax.random.split(key)

    # LevelBlockUp config (small, consistent with the module's __init__)
    n_blocks, n_layers = 2, 2
    in_filters, filters = 8, 16
    bottleneck_ratio = 0.5
    kernel_size, strides = 3, 2
    skip_filters, use_skip = 8, True
    N, H, W = 2, 16, 16

    x = jax.random.normal(k_x, (N, in_filters, H, W), jnp.float32)  # NCHW, like PyTorch

    params = init_level_block_up_params(
        k_p, n_blocks=n_blocks, n_layers=n_layers, in_filters=in_filters,
        filters=filters, bottleneck_ratio=bottleneck_ratio,
        kernel_size=kernel_size, strides=strides,
        skip_filters=skip_filters, use_skip=use_skip)

    _ = _roll_is_read_ahead()   # probe roll sign once, outside jit

    fwd = jax.jit(functools.partial(level_block_up_forward,
                                    strides=strides, use_skip=use_skip))
    out, skip = fwd(x, params)
    out = jax.block_until_ready(out)
    skip = jax.block_until_ready(skip)

    # sanity vs. pure-JAX reference
    ref_out, ref_skip = _ref_forward(x, params, strides=strides, use_skip=use_skip)
    assert out.shape == (N, filters, H // strides, W // strides), out.shape
    assert skip.shape == (N, skip_filters, H, W), skip.shape
    assert jnp.allclose(out, ref_out, rtol=1e-4, atol=1e-4)
    assert jnp.allclose(skip, ref_skip, rtol=1e-4, atol=1e-4)

    print("KERNEL_OK")
</pallas_src>

<mosaic_0001>
module attributes {stable_mosaic.version = 11 : i64} {
  func.func @k(%arg0: memref<8x256xf32, #tpu.memory_space<vmem>>, %arg1: memref<8x256xf32, #tpu.memory_space<vmem>>) attributes {dimension_semantics = [], scalar_prefetch = 0 : i64, scratch_operands = 0 : i64, tpu.core_type = #tpu.core_type<tc>} {
    %c0 = arith.constant 0 : index
    %c0_0 = arith.constant 0 : index
    %0 = vector.load %arg0[%c0, %c0_0] : memref<8x256xf32, #tpu.memory_space<vmem>>, vector<8x256xf32>
    %c1_i32 = arith.constant 1 : i32
    %1 = tpu.dynamic_rotate %0 by %c1_i32 dim 1 : vector<8x256xf32>, i32 -> vector<8x256xf32>
    %c0_1 = arith.constant 0 : index
    %c0_2 = arith.constant 0 : index
    %2 = vector.load %arg1[%c0_1, %c0_2] : memref<8x256xf32, #tpu.memory_space<vmem>>, vector<8x256xf32>
    tpu.vector_store %arg1[%c0_1, %c0_2], %1 {strides = array<i32>} : memref<8x256xf32, #tpu.memory_space<vmem>>, vector<8x256xf32>,
    return
  }
}

</mosaic_0001>

<llo_original>
// kernel: tpu_custom_call.1
$region0: #{tpu_custom_call.1}
  #allocation0 [shape = 'u32[]', space=smem, size = 0x4, offset = 0x4, fixed_abs, tag = 'smem constant byte address 0x4 - core index']
  #allocation1 [shape = 'u32[144,128]{1,0:T(1,128)}', space=vmem, size = 0x12000, scoped, tag = 'internal scratch']
  %s0 = inlined_call_operand.hbm [shape: f32[8,256], index: 0, kind: input, shape index: {}]
  %s1 = inlined_call_operand.hbm [shape: f32[8,256], index: 1, kind: output, shape index: {}]
  %s2 = sld [smem:[#allocation0]]
  $region18: #{tpu_custom_call.1} parent=0
    _
  %s4 = ssub.s32 1, %s2
  %s5 = scalar_select 0, %s4, %s2
  $region1: #{tpu_custom_call.1} parent=0
    #allocation2 [shape = 'u8[8192]{0}', space=vmem, size = 0x2000, scoped, tag = 'input window, operand 0, single buffered']
    #allocation3 [shape = 's32[1]{0}', space=sflag, size = 0x4, scoped, tag = 'scoped memory for tpu_custom_call.1']
    #allocation4 [shape = 's32[1]{0}', space=sflag, size = 0x4, scoped, tag = 'scoped memory for tpu_custom_call.1']
    #allocation5 [shape = 'u8[8192]{0}', space=vmem, size = 0x2000, scoped, tag = 'output window, operand 0, single buffered']
    %6 = vsyncpa [#allocation3], 0
    %7 = vsyncpa [#allocation4], 0
    // Predicated region
    $region2: #{tpu_custom_call.1} parent=1 // pred_check
      _
    $region3: #{tpu_custom_call.1} parent=1 // pred_check_branch
      %9 = sbr.rel (0) target = $region5
    $region4: #{tpu_custom_call.1} parent=1 // pred_region
      %s11 = ssub.s32 256, 256
      %12 = vsyncadd [#allocation3], %s11
      %s14 = sshll.u32 [#allocation2], 4
      %s15 = int_to_ptr.vmem [resolvable:$true] %s14
      %17 = dma.hbm_to_vmem [thread:$0]  %s0, 256, %s15, [#allocation3]
    $region5: #{tpu_custom_call.1} parent=1 // pred_fallthru
      _
    // Predicated region
    $region6: #{tpu_custom_call.1} parent=1 // pred_check
      _
    $region7: #{tpu_custom_call.1} parent=1 // pred_check_branch
      %19 = sbr.rel (0) target = $region9
    $region8: #{tpu_custom_call.1} parent=1 // pred_region
      %20 = dma.done [#allocation3], 256
    $region9: #{tpu_custom_call.1} parent=1 // pred_fallthru
      _
    %v21 = vld [vmem:[#allocation2] sm:$0xff]
    %v22 = vld [vmem:[#allocation2 + $0x8] sm:$0xff]
    %23 = vrot.lane.b32.xlu0 %v21, 1
    %v24 = vpop.permute.xlu0 %23
    %25 = vrot.lane.b32.xlu0 %v22, 1
    %v26 = vpop.permute.xlu0 %25
    %v27 = vlaneseq
    %v28 = vand.u32 %v27, 127
    %vm29 = vcmp.lt.s32.totalorder %v28, 1
    %v30 = vsel %vm29, %v24, %v26
    %v31 = vsel %vm29, %v26, %v24
    %32 = vst [vmem:[#allocation5] sm:$0xff] %v31
    %33 = vst [vmem:[#allocation5 + $0x8] sm:$0xff] %v30
    // Predicated region
    $region10: #{tpu_custom_call.1} parent=1 // pred_check
      _
    $region11: #{tpu_custom_call.1} parent=1 // pred_check_branch
      %35 = sbr.rel (0) target = $region13
    $region12: #{tpu_custom_call.1} parent=1 // pred_region
      %s37 = ssub.s32 256, 256
      %38 = vsyncadd [#allocation4], %s37
      %s40 = sshll.u32 [#allocation5], 4
      %s41 = int_to_ptr.vmem [resolvable:$true] %s40
      %43 = dma.vmem_to_hbm [thread:$0]  %s41, 256, %s1, [#allocation4]
    $region13: #{tpu_custom_call.1} parent=1 // pred_fallthru
      _
    // Predicated region
    $region14: #{tpu_custom_call.1} parent=1 // pred_check
      _
    $region15: #{tpu_custom_call.1} parent=1 // pred_check_branch
      %45 = sbr.rel (0) target = $region17
    $region16: #{tpu_custom_call.1} parent=1 // pred_region
      %46 = dma.done [#allocation4], 256
    $region17: #{tpu_custom_call.1} parent=1 // pred_fallthru
      _
    %47 = vsyncpa [#allocation3], 1
    %48 = vsyncpa [#allocation4], 1

</llo_original>
